<compile_context>
chip_gen: v7x
topology: tpu7x:2x2x1
jax: 0.10.0
libtpu: 0.0.40
codegen_flags: <defaults>
</compile_context>

<pallas_src>
import jax
import jax.numpy as jnp
from jax.experimental import pallas as pl
from jax.experimental.pallas import tpu as pltpu


def mlp_kernel(x_ref, p_ref, o_ref):
    # x_ref: [1, BLK]   batch on lanes
    # p_ref: [HP, 128]  packed params: col0=w1, col1=b1, col2=w2, col3(row0)=b2
    # o_ref: [1, BLK]
    x = x_ref[...]                       # [1, BLK]
    p = p_ref[...]                       # [HP, 128]
    w1 = p[:, 0:1]                       # [HP, 1]
    b1 = p[:, 1:2]                       # [HP, 1]
    w2 = p[:, 2:3]                       # [HP, 1]
    b2 = p[0:1, 3:4]                     # [1, 1]

    # hidden = relu(x * w1 + b1): rank-1 outer product on the VPU (no MXU).
    h = jnp.maximum(w1 * x + b1, 0.0)                      # [HP, BLK]
    # out = sum_h(h * w2) + b2: VPU multiply + sublane reduction.
    out = jnp.sum(h * w2, axis=0, keepdims=True) + b2      # [1, BLK]
    o_ref[...] = out.astype(o_ref.dtype)


def net_forward(x, w1, b1, w2, b2):
    """x: [B, 1]; w1: [1, H]; b1: [1, H]; w2: [H, 1]; b2: [1, 1] -> [B, 1]"""
    B, F = x.shape
    H = w1.shape[1]
    O = w2.shape[1]
    assert F == 1 and O == 1, "kernel is specialized for n_feature=1, n_output=1"

    LANES = 128
    # Lane block per grid step: big enough to amortize per-step overhead,
    # small enough to keep the [HP, BLK] intermediate comfortably in vregs/VMEM.
    BLK = min(1024, ((B + LANES - 1) // LANES) * LANES)
    BP = ((B + BLK - 1) // BLK) * BLK            # pad batch to a block multiple
    HP = ((H + 7) // 8) * 8                      # pad hidden to sublane multiple

    # Batch on the lane axis, zero-padded (padded lanes are sliced away below).
    x_lane = jnp.zeros((1, BP), jnp.float32).at[0, :B].set(
        x[:, 0].astype(jnp.float32))

    # One contiguous, tile-aligned parameter slab (zero padding is benign:
    # padded hidden rows give relu(0)=0 and w2=0, contributing nothing).
    params = jnp.zeros((HP, LANES), jnp.float32)
    params = params.at[:H, 0].set(w1[0, :].astype(jnp.float32))
    params = params.at[:H, 1].set(b1.reshape(H).astype(jnp.float32))
    params = params.at[:H, 2].set(w2[:, 0].astype(jnp.float32))
    params = params.at[0, 3].set(b2.reshape(-1)[0].astype(jnp.float32))

    out = pl.pallas_call(
        mlp_kernel,
        out_shape=jax.ShapeDtypeStruct((1, BP), jnp.float32),
        grid=(BP // BLK,),
        in_specs=[
            pl.BlockSpec((1, BLK), lambda i: (0, i)),     # x tile  [1, BLK]
            pl.BlockSpec((HP, LANES), lambda i: (0, 0)),  # params resident
        ],
        out_specs=pl.BlockSpec((1, BLK), lambda i: (0, i)),
        compiler_params=pltpu.CompilerParams(
            dimension_semantics=("parallel",)),
    )(x_lane, params)

    return out[0, :B].reshape(B, O).astype(x.dtype)


def reference_forward(x, w1, b1, w2, b2):
    h = jnp.maximum(x @ w1 + b1, 0.0)
    return h @ w2 + b2


if __name__ == "__main__":
    # Shapes implied by the module's usage: x = linspace(-1, 1, 100)[:, None]
    # -> batch=100, n_feature=1.  Pick n_hidden=32, n_output=1.
    B, F, H, O = 100, 1, 32, 1

    key = jax.random.PRNGKey(0)
    k1, k2, k3, k4 = jax.random.split(key, 4)

    # Input: same data the PyTorch snippet builds.
    x = jnp.linspace(-1.0, 1.0, B, dtype=jnp.float32).reshape(B, F)

    # Deterministic parameter init (weights stored transposed: [in, out]).
    w1 = jax.random.uniform(k1, (F, H), jnp.float32, -1.0, 1.0)
    b1 = jax.random.uniform(k2, (1, H), jnp.float32, -1.0, 1.0)
    w2 = jax.random.uniform(k3, (H, O), jnp.float32, -1.0, 1.0) / jnp.sqrt(H)
    b2 = jax.random.uniform(k4, (1, O), jnp.float32, -1.0, 1.0) / jnp.sqrt(H)

    y = jax.block_until_ready(net_forward(x, w1, b1, w2, b2))
    y_ref = reference_forward(x, w1, b1, w2, b2)

    assert y.shape == (B, O), y.shape
    assert jnp.allclose(y, y_ref, atol=1e-5, rtol=1e-5), "mismatch vs reference"

    print("KERNEL_OK")
</pallas_src>

<mosaic_0001>
module attributes {stable_mosaic.version = 11 : i64} {
  func.func @mlp_kernel(%arg0: i32, %arg1: memref<1x128xf32, #tpu.memory_space<vmem>>, %arg2: memref<32x128xf32, #tpu.memory_space<vmem>>, %arg3: memref<1x128xf32, #tpu.memory_space<vmem>>) attributes {dimension_semantics = [#tpu.dimension_semantics<parallel>], iteration_bounds = array<i64: 1>, scalar_prefetch = 0 : i64, scratch_operands = 0 : i64, tpu.core_type = #tpu.core_type<tc>, window_params = [{transform_indices = @transform_0, window_bounds = array<i64: 1, 128>}, {pipeline_mode = #tpu.pipeline_mode<synchronous>, transform_indices = @transform_1, window_bounds = array<i64: 32, 128>}, {transform_indices = @transform_2, window_bounds = array<i64: 1, 128>}]} {
    %c0 = arith.constant 0 : index
    %c0_0 = arith.constant 0 : index
    %0 = vector.load %arg1[%c0, %c0_0] : memref<1x128xf32, #tpu.memory_space<vmem>>, vector<1x128xf32>
    %c0_1 = arith.constant 0 : index
    %c0_2 = arith.constant 0 : index
    %1 = vector.load %arg2[%c0_1, %c0_2] : memref<32x128xf32, #tpu.memory_space<vmem>>, vector<32x128xf32>
    %2 = vector.extract_strided_slice %1 {offsets = [0, 0], sizes = [32, 1], strides = [1, 1]} : vector<32x128xf32> to vector<32x1xf32>
    %3 = vector.extract_strided_slice %1 {offsets = [0, 1], sizes = [32, 1], strides = [1, 1]} : vector<32x128xf32> to vector<32x1xf32>
    %4 = vector.extract_strided_slice %1 {offsets = [0, 2], sizes = [32, 1], strides = [1, 1]} : vector<32x128xf32> to vector<32x1xf32>
    %5 = vector.extract_strided_slice %1 {offsets = [0, 3], sizes = [1, 1], strides = [1, 1]} : vector<32x128xf32> to vector<1x1xf32>
    %6 = vector.broadcast %2 : vector<32x1xf32> to vector<32x128xf32>
    %7 = vector.broadcast %0 : vector<1x128xf32> to vector<32x128xf32>
    %8 = arith.mulf %6, %7 : vector<32x128xf32>
    %9 = vector.broadcast %3 : vector<32x1xf32> to vector<32x128xf32>
    %10 = arith.addf %8, %9 : vector<32x128xf32>
    %cst = arith.constant 0.000000e+00 : f32
    %11 = vector.broadcast %cst : f32 to vector<32x128xf32>
    %12 = arith.maximumf %10, %11 : vector<32x128xf32>
    %13 = vector.broadcast %4 : vector<32x1xf32> to vector<32x128xf32>
    %14 = arith.mulf %12, %13 : vector<32x128xf32>
    %cst_3 = arith.constant dense<0.000000e+00> : vector<128xf32>
    %15 = vector.multi_reduction <add>, %14, %cst_3 [0] : vector<32x128xf32> to vector<128xf32>
    %16 = vector.shape_cast %15 : vector<128xf32> to vector<1x128xf32>
    %17 = vector.broadcast %5 : vector<1x1xf32> to vector<1x128xf32>
    %18 = arith.addf %16, %17 : vector<1x128xf32>
    %c0_4 = arith.constant 0 : index
    %c0_5 = arith.constant 0 : index
    %19 = vector.load %arg3[%c0_4, %c0_5] : memref<1x128xf32, #tpu.memory_space<vmem>>, vector<1x128xf32>
    tpu.vector_store %arg3[%c0_4, %c0_5], %18 {strides = array<i32>} : memref<1x128xf32, #tpu.memory_space<vmem>>, vector<1x128xf32>,
    return
  }
  func.func @transform_0(%arg0: i32) -> (i32, i32) {
    %c0_i32 = arith.constant 0 : i32
    %c0_i32_0 = arith.constant 0 : i32
    return %c0_i32, %arg0 : i32, i32
  }
  func.func @transform_1(%arg0: i32) -> (i32, i32) {
    %c0_i32 = arith.constant 0 : i32
    %c0_i32_0 = arith.constant 0 : i32
    %c0_i32_1 = arith.constant 0 : i32
    return %c0_i32, %c0_i32_0 : i32, i32
  }
  func.func @transform_2(%arg0: i32) -> (i32, i32) {
    %c0_i32 = arith.constant 0 : i32
    %c0_i32_0 = arith.constant 0 : i32
    return %c0_i32, %arg0 : i32, i32
  }
}

</mosaic_0001>

<llo_original>
// kernel: tpu_custom_call.1
$region0: #{tpu_custom_call.1}
  #allocation0 [shape = 'u32[]', space=smem, size = 0x4, offset = 0x4, fixed_abs, tag = 'smem constant byte address 0x4 - core index']
  #allocation1 [shape = 'u32[144,128]{1,0:T(1,128)}', space=vmem, size = 0x12000, scoped, tag = 'internal scratch']
  %s0 = inlined_call_operand.hbm [shape: f32[1,128], index: 0, kind: input, shape index: {}]
  %s1 = inlined_call_operand.hbm [shape: f32[32,128], index: 1, kind: input, shape index: {}]
  %s2 = inlined_call_operand.hbm [shape: f32[1,128], index: 2, kind: output, shape index: {}]
  %s3 = sld [smem:[#allocation0]]
  $region26: #{tpu_custom_call.1} parent=0
    _
  %s5 = ssub.s32 1, %s3
  %s6 = scalar_select 0, %s5, %s3
  $region1: #{tpu_custom_call.1} parent=0
    #allocation2 [shape = 'u8[512]{0}', space=vmem, size = 0x400, scoped, tag = 'input window, operand 0, single buffered']
    #allocation3 [shape = 's32[1]{0}', space=sflag, size = 0x4, scoped, tag = 'scoped memory for tpu_custom_call.1']
    #allocation4 [shape = 's32[1]{0}', space=sflag, size = 0x4, scoped, tag = 'scoped memory for tpu_custom_call.1']
    #allocation5 [shape = 'u8[16384]{0}', space=vmem, size = 0x4000, scoped, tag = 'input window, operand 1, single buffered']
    #allocation6 [shape = 's32[1]{0}', space=sflag, size = 0x4, scoped, tag = 'scoped memory for tpu_custom_call.1']
    #allocation7 [shape = 'u8[512]{0}', space=vmem, size = 0x400, scoped, tag = 'output window, operand 0, single buffered']
    %7 = vsyncpa [#allocation3], 0
    %8 = vsyncpa [#allocation6], 0
    %9 = vsyncpa [#allocation4], 0
    // Predicated region
    $region2: #{tpu_custom_call.1} parent=1 // pred_check
      _
    $region3: #{tpu_custom_call.1} parent=1 // pred_check_branch
      %11 = sbr.rel (0) target = $region5
    $region4: #{tpu_custom_call.1} parent=1 // pred_region
      %s13 = ssub.s32 16, 16
      %14 = vsyncadd [#allocation3], %s13
      %s16 = sshll.u32 [#allocation2], 4
      %s17 = int_to_ptr.vmem [resolvable:$true] %s16
      %19 = dma.hbm_to_vmem [thread:$0]  %s0, 16, %s17, [#allocation3]
    $region5: #{tpu_custom_call.1} parent=1 // pred_fallthru
      _
    // Predicated region
    $region6: #{tpu_custom_call.1} parent=1 // pred_check
      _
    $region7: #{tpu_custom_call.1} parent=1 // pred_check_branch
      %21 = sbr.rel (0) target = $region9
    $region8: #{tpu_custom_call.1} parent=1 // pred_region
      %s23 = ssub.s32 512, 512
      %24 = vsyncadd [#allocation6], %s23
      %s25 = sshll.u32 [#allocation5], 4
      %s26 = int_to_ptr.vmem [resolvable:$true] %s25
      %31 = dma.hbm_to_vmem [thread:$0]  %s1, 512, %s26, [#allocation6], 128, 128, 8
    $region9: #{tpu_custom_call.1} parent=1 // pred_fallthru
      _
    // Predicated region
    $region10: #{tpu_custom_call.1} parent=1 // pred_check
      _
    $region11: #{tpu_custom_call.1} parent=1 // pred_check_branch
      %33 = sbr.rel (0) target = $region13
    $region12: #{tpu_custom_call.1} parent=1 // pred_region
      %34 = dma.done [#allocation3], 16
    $region13: #{tpu_custom_call.1} parent=1 // pred_fallthru
      _
    // Predicated region
    $region14: #{tpu_custom_call.1} parent=1 // pred_check
      _
    $region15: #{tpu_custom_call.1} parent=1 // pred_check_branch
      %36 = sbr.rel (0) target = $region17
    $region16: #{tpu_custom_call.1} parent=1 // pred_region
      %37 = dma.done [#allocation6], 512
    $region17: #{tpu_custom_call.1} parent=1 // pred_fallthru
      _
    %v38 = vld [vmem:[#allocation2] sm:$0x1]
    %v39 = vld [vmem:[#allocation5] sm:$0xff]
    %v40 = vld [vmem:[#allocation5 + $0x8] sm:$0xff]
    %v41 = vld [vmem:[#allocation5 + $0x10] sm:$0xff]
    %v42 = vld [vmem:[#allocation5 + $0x18] sm:$0xff]
    %44 = vset.pattern.permute.xlu0 0
    %45 = vperm.xlu0 %44, %v39
    %v46 = vpop.permute.xlu0 %45
    %49 = vset.pattern.permute.xlu0 0
    %50 = vperm.xlu0 %49, %v40
    %v51 = vpop.permute.xlu0 %50
    %54 = vset.pattern.permute.xlu0 0
    %55 = vperm.xlu0 %54, %v41
    %v56 = vpop.permute.xlu0 %55
    %59 = vset.pattern.permute.xlu0 0
    %60 = vperm.xlu0 %59, %v42
    %v61 = vpop.permute.xlu0 %60
    %v64 = vlaneseq
    %v65 = vshrl.u32 %v64, 7
    %v66 = vsub.s32 0, %v65
    %v67 = vrot.slane %v38, %v66
    %v69 = vmul.f32 %v46, %v67
    %v70 = vmul.f32 %v51, %v67
    %v71 = vmul.f32 %v56, %v67
    %v72 = vmul.f32 %v61, %v67
    %73 = vset.pattern.permute.xlu0 1
    %74 = vperm.xlu0 %73, %v39
    %v75 = vpop.permute.xlu0 %74
    %77 = vset.pattern.permute.xlu0 1
    %78 = vperm.xlu0 %77, %v40
    %v79 = vpop.permute.xlu0 %78
    %81 = vset.pattern.permute.xlu0 1
    %82 = vperm.xlu0 %81, %v41
    %v83 = vpop.permute.xlu0 %82
    %85 = vset.pattern.permute.xlu0 1
    %86 = vperm.xlu0 %85, %v42
    %v87 = vpop.permute.xlu0 %86
    %v89 = vadd.f32 %v69, %v75
    %v90 = vadd.f32 %v70, %v79
    %v91 = vadd.f32 %v71, %v83
    %v92 = vadd.f32 %v72, %v87
    %v93 = vmax.f32 %v89, 0.0
    %v94 = vmax.f32 %v90, 0.0
    %v95 = vmax.f32 %v91, 0.0
    %v96 = vmax.f32 %v92, 0.0
    %97 = vset.pattern.permute.xlu0 2
    %98 = vperm.xlu0 %97, %v39
    %v99 = vpop.permute.xlu0 %98
    %101 = vset.pattern.permute.xlu0 2
    %102 = vperm.xlu0 %101, %v40
    %v103 = vpop.permute.xlu0 %102
    %105 = vset.pattern.permute.xlu0 2
    %106 = vperm.xlu0 %105, %v41
    %v107 = vpop.permute.xlu0 %106
    %109 = vset.pattern.permute.xlu0 2
    %110 = vperm.xlu0 %109, %v42
    %v111 = vpop.permute.xlu0 %110
    %v113 = vmul.f32 %v93, %v99
    %v114 = vmul.f32 %v94, %v103
    %v115 = vmul.f32 %v95, %v107
    %v116 = vmul.f32 %v96, %v111
    %v117 = vadd.f32 %v113, %v114
    %v118 = vadd.f32 %v117, %v115
    %v119 = vadd.f32 %v118, %v116
    %v120 = vrot.slane %v119, 4
    %v121 = vadd.f32 %v119, %v120
    %v122 = vrot.slane %v121, 2
    %v123 = vadd.f32 %v121, %v122
    %v124 = vrot.slane %v123, 1
    %v125 = vadd.f32 %v123, %v124
    %126 = vset.pattern.permute.xlu0 3
    %127 = vperm.xlu0 %126, %v39
    %v128 = vpop.permute.xlu0 %127
    %v130 = vadd.f32 %v125, %v128
    %131 = vst [vmem:[#allocation7] sm:$0x1] %v130
    // Predicated region
    $region18: #{tpu_custom_call.1} parent=1 // pred_check
      _
    $region19: #{tpu_custom_call.1} parent=1 // pred_check_branch
      %133 = sbr.rel (0) target = $region21
    $region20: #{tpu_custom_call.1} parent=1 // pred_region
      %s135 = ssub.s32 16, 16
      %136 = vsyncadd [#allocation4], %s135
      %s138 = sshll.u32 [#allocation7], 4
      %s139 = int_to_ptr.vmem [resolvable:$true] %s138
      %141 = dma.vmem_to_hbm [thread:$0]  %s139, 16, %s2, [#allocation4]
    $region21: #{tpu_custom_call.1} parent=1 // pred_fallthru
      _
    // Predicated region
    $region22: #{tpu_custom_call.1} parent=1 // pred_check
      _
    $region23: #{tpu_custom_call.1} parent=1 // pred_check_branch
      %143 = sbr.rel (0) target = $region25
    $region24: #{tpu_custom_call.1} parent=1 // pred_region
      %144 = dma.done [#allocation4], 16
    $region25: #{tpu_custom_call.1} parent=1 // pred_fallthru
      _
    %145 = vsyncpa [#allocation3], 1
    %146 = vsyncpa [#allocation6], 1
    %147 = vsyncpa [#allocation4], 1

</llo_original>
